<compile_context>
chip_gen: v6e
topology: v6e:2x2x1
jax: 0.10.0
libtpu: 0.0.40
codegen_flags: <defaults>
</compile_context>

<pallas_src>
import functools
import math

import numpy as np
import jax
import jax.numpy as jnp
from jax.experimental import pallas as pl
from jax.experimental.pallas import tpu as pltpu

# ---- config (the globals the PyTorch module refers to) ----
d_model = 32
d_ff = 64
batch = 2
seq_len = 8

LN_EPS = 1e-5
MATMUL_DTYPE = jnp.bfloat16   # MXU-native operand dtype; accumulation stays f32.


# =========================== fused Pallas kernel ===========================

def _poswise_ffn_kernel(x_ref, w1_ref, w2_ref, o_ref, *, eps, matmul_dtype):
    """Fused: h = relu(x @ w1); y = h @ w2 + x; o = LayerNorm(y) with gamma=1, beta=0."""
    x = x_ref[...]                                                   # f32 (residual / LN path)

    # MXU matmuls on bf16 operands, f32 accumulation.
    h = jnp.dot(x.astype(matmul_dtype), w1_ref[...],
                preferred_element_type=jnp.float32)
    h = jnp.maximum(h, 0.0)                                          # ReLU (VPU, f32)
    y = jnp.dot(h.astype(matmul_dtype), w2_ref[...],
                preferred_element_type=jnp.float32) + x              # residual in f32

    # One-pass LayerNorm stats (biased variance, matching PyTorch LN).
    inv_d = 1.0 / y.shape[-1]
    mean = jnp.sum(y, axis=-1, keepdims=True) * inv_d
    mean_sq = jnp.sum(y * y, axis=-1, keepdims=True) * inv_d
    var = mean_sq - mean * mean
    o_ref[...] = (y - mean) * jax.lax.rsqrt(var + eps)               # weight=1, bias=0


def poswise_feed_forward(inputs, w1, w2, *, eps=LN_EPS, tile_m=256):
    """inputs: (..., d_model) f32; w1: (d_model, d_ff); w2: (d_ff, d_model).

    Weights should be pre-cast to the matmul dtype (bf16) by the caller, once.
    """
    orig_shape = inputs.shape
    D = orig_shape[-1]
    F = w1.shape[1]
    x2d = inputs.reshape(-1, D)
    if x2d.dtype != jnp.float32:
        x2d = x2d.astype(jnp.float32)
    M = x2d.shape[0]

    kernel = functools.partial(_poswise_ffn_kernel, eps=eps, matmul_dtype=w1.dtype)

    if M <= tile_m:
        # Small problem: single un-gridded call, all operands fully VMEM-resident.
        out = pl.pallas_call(
            kernel,
            out_shape=jax.ShapeDtypeStruct((M, D), jnp.float32),
            in_specs=[pl.BlockSpec(memory_space=pltpu.MemorySpace.VMEM),
                      pl.BlockSpec(memory_space=pltpu.MemorySpace.VMEM),
                      pl.BlockSpec(memory_space=pltpu.MemorySpec.VMEM)
                      if False else pl.BlockSpec(memory_space=pltpu.MemorySpace.VMEM)],
            out_specs=pl.BlockSpec(memory_space=pltpu.MemorySpace.VMEM),
        )(x2d, w1, w2)
    else:
        # Scaling path: grid over row tiles; weights stay VMEM-resident (index_map -> (0,0)).
        n_tiles = pl.cdiv(M, tile_m)
        m_pad = n_tiles * tile_m
        x_in = x2d if m_pad == M else jnp.pad(x2d, ((0, m_pad - M), (0, 0)))
        out = pl.pallas_call(
            kernel,
            out_shape=jax.ShapeDtypeStruct((m_pad, D), jnp.float32),
            grid=(n_tiles,),
            in_specs=[pl.BlockSpec((tile_m, D), lambda i: (i, 0)),
                      pl.BlockSpec((D, F), lambda i: (0, 0)),
                      pl.BlockSpec((F, D), lambda i: (0, 0))],
            out_specs=pl.BlockSpec((tile_m, D), lambda i: (i, 0)),
            compiler_params=pltpu.CompilerParams(
                dimension_semantics=("parallel",)),   # v7x: split row tiles across 2 TCs
        )(x_in, w1, w2)
        if m_pad != M:
            out = out[:M]
    return out.reshape(orig_shape)


# =========================== deterministic parameter init ===========================

def init_params(key):
    k1, k2 = jax.random.split(key, 2)

    def lin(k, fan_in, fan_out):
        # mimic PyTorch nn.Linear default init, stored as (in_features, out_features)
        bound = 1.0 / math.sqrt(fan_in)
        return jax.random.uniform(k, (fan_in, fan_out), jnp.float32, -bound, bound)

    return dict(w1=lin(k1, d_model, d_ff), w2=lin(k2, d_ff, d_model))


# =========================== pure-JAX reference (correctness check) ===========================

def reference_forward(inputs, w1, w2, eps=LN_EPS):
    """Same math as the PyTorch module; matmul operand dtype follows the weight dtype."""
    x = inputs.astype(jnp.float32)
    h = jnp.maximum(jnp.dot(x.astype(w1.dtype), w1,
                            preferred_element_type=jnp.float32), 0.0)
    y = jnp.dot(h.astype(w2.dtype), w2, preferred_element_type=jnp.float32) + x
    mean = jnp.mean(y, axis=-1, keepdims=True)
    var = jnp.mean((y - mean) ** 2, axis=-1, keepdims=True)          # biased var (PyTorch LN)
    return (y - mean) * jax.lax.rsqrt(var + eps)


if __name__ == "__main__":
    key = jax.random.PRNGKey(0)
    kp, kx, kx_big = jax.random.split(key, 3)
    params = init_params(kp)

    # Pre-cast weights ONCE outside the hot path (perf feedback: no per-call astype).
    w1 = params["w1"].astype(MATMUL_DTYPE)
    w2 = params["w2"].astype(MATMUL_DTYPE)

    inputs = jax.random.normal(kx, (batch, seq_len, d_model), jnp.float32)

    # --- small case: un-gridded, fully VMEM-resident call ---
    out = poswise_feed_forward(inputs, w1, w2)
    jax.block_until_ready(out)
    assert out.shape == (batch, seq_len, d_model)

    # Parity against a reference doing identical bf16-operand / f32-accum matmuls.
    ref_matched = reference_forward(inputs, w1, w2)
    np.testing.assert_allclose(np.asarray(out), np.asarray(ref_matched),
                               rtol=1e-4, atol=1e-4)

    # Semantic parity with the all-f32 PyTorch module (only bf16 quantization noise).
    ref_f32 = reference_forward(inputs, params["w1"], params["w2"])
    np.testing.assert_allclose(np.asarray(out), np.asarray(ref_f32),
                               rtol=0.0, atol=1e-1)

    # --- scaling path: grid over M with VMEM-resident weights (and ragged M padding) ---
    big = jax.random.normal(kx_big, (8, 130, d_model), jnp.float32)   # M = 1040 rows
    out_big = poswise_feed_forward(big, w1, w2, tile_m=256)
    jax.block_until_ready(out_big)
    assert out_big.shape == big.shape
    ref_big = reference_forward(big, w1, w2)
    np.testing.assert_allclose(np.asarray(out_big), np.asarray(ref_big),
                               rtol=1e-4, atol=1e-4)

    print("KERNEL_OK")
</pallas_src>

<mosaic_0001>
module attributes {stable_mosaic.version = 11 : i64} {
  func.func @_poswise_ffn_kernel(%arg0: memref<16x32xf32, #tpu.memory_space<vmem>>, %arg1: memref<32x64xbf16, #tpu.memory_space<vmem>>, %arg2: memref<64x32xbf16, #tpu.memory_space<vmem>>, %arg3: memref<16x32xf32, #tpu.memory_space<vmem>>) attributes {dimension_semantics = [], scalar_prefetch = 0 : i64, scratch_operands = 0 : i64, tpu.core_type = #tpu.core_type<tc>} {
    %c0 = arith.constant 0 : index
    %c0_0 = arith.constant 0 : index
    %0 = vector.load %arg0[%c0, %c0_0] : memref<16x32xf32, #tpu.memory_space<vmem>>, vector<16x32xf32>
    %1 = arith.truncf %0 : vector<16x32xf32> to vector<16x32xbf16>
    %c0_1 = arith.constant 0 : index
    %c0_2 = arith.constant 0 : index
    %2 = vector.load %arg1[%c0_1, %c0_2] : memref<32x64xbf16, #tpu.memory_space<vmem>>, vector<32x64xbf16>
    %cst = arith.constant dense<0.000000e+00> : vector<16x64xf32>
    %3 = tpu.matmul %1, %2, %cst {dimension_numbers = #tpu.dot_dimension_numbers<[1], [0], [0], [1], [0, 0, 1, 1], [], []>} : vector<16x32xbf16>, vector<32x64xbf16>, vector<16x64xf32> -> vector<16x64xf32>
    %cst_3 = arith.constant 0.000000e+00 : f32
    %4 = vector.broadcast %cst_3 : f32 to vector<16x64xf32>
    %5 = arith.maximumf %3, %4 : vector<16x64xf32>
    %6 = arith.truncf %5 : vector<16x64xf32> to vector<16x64xbf16>
    %c0_4 = arith.constant 0 : index
    %c0_5 = arith.constant 0 : index
    %7 = vector.load %arg2[%c0_4, %c0_5] : memref<64x32xbf16, #tpu.memory_space<vmem>>, vector<64x32xbf16>
    %cst_6 = arith.constant dense<0.000000e+00> : vector<16x32xf32>
    %8 = tpu.matmul %6, %7, %cst_6 {dimension_numbers = #tpu.dot_dimension_numbers<[1], [0], [0], [1], [0, 0, 1, 1], [], []>} : vector<16x64xbf16>, vector<64x32xbf16>, vector<16x32xf32> -> vector<16x32xf32>
    %9 = arith.addf %8, %0 : vector<16x32xf32>
    %cst_7 = arith.constant dense<0.000000e+00> : vector<16xf32>
    %10 = vector.multi_reduction <add>, %9, %cst_7 [1] : vector<16x32xf32> to vector<16xf32>
    %11 = vector.shape_cast %10 : vector<16xf32> to vector<16x1xf32>
    %cst_8 = arith.constant 3.125000e-02 : f32
    %12 = vector.broadcast %cst_8 : f32 to vector<16x1xf32>
    %13 = arith.mulf %11, %12 : vector<16x1xf32>
    %14 = arith.mulf %9, %9 : vector<16x32xf32>
    %cst_9 = arith.constant dense<0.000000e+00> : vector<16xf32>
    %15 = vector.multi_reduction <add>, %14, %cst_9 [1] : vector<16x32xf32> to vector<16xf32>
    %16 = vector.shape_cast %15 : vector<16xf32> to vector<16x1xf32>
    %cst_10 = arith.constant 3.125000e-02 : f32
    %17 = vector.broadcast %cst_10 : f32 to vector<16x1xf32>
    %18 = arith.mulf %16, %17 : vector<16x1xf32>
    %19 = arith.mulf %13, %13 : vector<16x1xf32>
    %20 = arith.subf %18, %19 : vector<16x1xf32>
    %21 = vector.broadcast %13 : vector<16x1xf32> to vector<16x32xf32>
    %22 = arith.subf %9, %21 : vector<16x32xf32>
    %cst_11 = arith.constant 9.99999974E-6 : f32
    %23 = vector.broadcast %cst_11 : f32 to vector<16x1xf32>
    %24 = arith.addf %20, %23 : vector<16x1xf32>
    %25 = math.rsqrt %24 : vector<16x1xf32>
    %26 = vector.broadcast %25 : vector<16x1xf32> to vector<16x32xf32>
    %27 = arith.mulf %22, %26 : vector<16x32xf32>
    %c0_12 = arith.constant 0 : index
    %c0_13 = arith.constant 0 : index
    %28 = vector.load %arg3[%c0_12, %c0_13] : memref<16x32xf32, #tpu.memory_space<vmem>>, vector<16x32xf32>
    tpu.vector_store %arg3[%c0_12, %c0_13], %27 {strides = array<i32>} : memref<16x32xf32, #tpu.memory_space<vmem>>, vector<16x32xf32>,
    return
  }
}

</mosaic_0001>

<llo_original>
// kernel: tpu_custom_call.1
$region0: #{tpu_custom_call.1}
  #allocation0 [shape = 'u32[]', space=smem, size = 0x4, offset = 0x4, fixed_abs, tag = 'smem constant byte address 0x4 - core index']
  #allocation1 [shape = 'u32[144,128]{1,0:T(1,128)}', space=vmem, size = 0x12000, scoped, tag = 'internal scratch']
  %s0 = inlined_call_operand.vmem [shape: f32[16,32], index: 0, kind: input, shape index: {}]
  %s1 = inlined_call_operand.vmem [shape: bf16[32,64], index: 1, kind: input, shape index: {}]
  %s2 = inlined_call_operand.vmem [shape: bf16[64,32], index: 2, kind: input, shape index: {}]
  %s3 = inlined_call_operand.hbm [shape: f32[16,32], index: 3, kind: output, shape index: {}]
  %s4 = sld [smem:[#allocation0]]
  $region22: #{tpu_custom_call.1} parent=0
    _
  %s6 = ssub.s32 1, %s4
  %s7 = scalar_select 0, %s6, %s4
  $region1: #{tpu_custom_call.1} parent=0
    #allocation2 [shape = 'u8[8192]{0}', space=vmem, size = 0x2000, scoped, tag = 'output window, operand 0, single buffered']
    #allocation3 [shape = 's32[1]{0}', space=sflag, size = 0x4, scoped, tag = 'scoped memory for tpu_custom_call.1']
    %8 = vsyncpa [#allocation3], 0
    // Predicated region
    $region2: #{tpu_custom_call.1} parent=1 // pred_check
      _
    $region3: #{tpu_custom_call.1} parent=1 // pred_check_branch
      %10 = sbr.rel (0) target = $region5
    $region4: #{tpu_custom_call.1} parent=1 // pred_region
      _
    $region5: #{tpu_custom_call.1} parent=1 // pred_fallthru
      _
    // Predicated region
    $region6: #{tpu_custom_call.1} parent=1 // pred_check
      _
    $region7: #{tpu_custom_call.1} parent=1 // pred_check_branch
      %12 = sbr.rel (0) target = $region9
    $region8: #{tpu_custom_call.1} parent=1 // pred_region
      _
    $region9: #{tpu_custom_call.1} parent=1 // pred_fallthru
      _
    // Predicated region
    $region10: #{tpu_custom_call.1} parent=1 // pred_check
      _
    $region11: #{tpu_custom_call.1} parent=1 // pred_check_branch
      %14 = sbr.rel (0) target = $region13
    $region12: #{tpu_custom_call.1} parent=1 // pred_region
      _
    $region13: #{tpu_custom_call.1} parent=1 // pred_fallthru
      _
    %v16 = vld [vmem:[%s0] sm:$0xff]
    %v17 = vld [vmem:[%s0 + $0x8] sm:$0xff]
    %v18 = vpack.c.bf16 %v17, %v16
    %v19 = vld [vmem:[%s1] sm:$0xf]
    %v20 = vld [vmem:[%s1 + $0x4] sm:$0xf]
    %v21 = vld [vmem:[%s1 + $0x8] sm:$0xf]
    %v22 = vld [vmem:[%s1 + $0xc] sm:$0xf]
    %v27 = vunpack.c.l.b16 %v19
    %v28 = vunpack.c.l.b16 %v20
    %v29 = vunpack.c.l.b16 %v21
    %v30 = vunpack.c.l.b16 %v22
    %v31 = vpack.c.b16 %v28, %v27
    %v32 = vpack.c.b16 %v30, %v29
    %vm35 = vcmask 261120
    %v37 = vsel %vm35, %v18, 0
    %39 = vmatprep.subr.bf16.mxu0 0
    %40 = vmatpush1.bf16.msra.mxu0 0
    %41 = vmatprep.subr.bf16.mxu0 0
    %42 = vmatpush1.bf16.msra.mxu0 0
    %43 = vmatprep.subr.bf16.mxu0 0
    %44 = vmatpush1.bf16.msra.mxu0 0
    %45 = vmatprep.subr.bf16.mxu0 0
    %46 = vmatpush1.bf16.msra.mxu0 0
    %47 = vmatprep.subr.bf16.mxu0 0
    %48 = vmatpush1.bf16.msra.mxu0 0
    %49 = vmatprep.subr.bf16.mxu0 0
    %50 = vmatpush1.bf16.msra.mxu0 0
    %51 = vmatprep.subr.bf16.mxu0 0
    %52 = vmatpush1.bf16.msra.mxu0 %v32
    %53 = vmatprep.subr.bf16.mxu0 0
    %54 = vmatpush1.bf16.msra.mxu0 %v31
    %55 = vmatprep.subr.bf16.mxu0 0
    %56 = vmatpush2.bf16.msra.mxu0 0
    %57 = vmatprep.subr.bf16.mxu0 0
    %58 = vmatpush2.bf16.msra.mxu0 0
    %59 = vmatprep.subr.bf16.mxu0 0
    %60 = vmatpush2.bf16.msra.mxu0 0
    %61 = vmatprep.subr.bf16.mxu0 0
    %62 = vmatpush2.bf16.msra.mxu0 0
    %63 = vmatprep.subr.bf16.mxu0 0
    %64 = vmatpush2.bf16.msra.mxu0 0
    %65 = vmatprep.subr.bf16.mxu0 0
    %66 = vmatpush2.bf16.msra.mxu0 0
    %67 = vmatprep.subr.bf16.mxu0 0
    %68 = vmatpush2.bf16.msra.mxu0 0
    %69 = vmatprep.subr.bf16.mxu0 0
    %70 = vmatpush2.bf16.msra.mxu0 0
    %71 = vmatprep.mubr.bf16.mxu0 0
    %72 = vmatmul.mubr.bf16.gmra.mxu0 %v37
    %v73 = vpop.f32.mrf.mxu0
    %v74 = vadd.f32 0.0, %v73
    %v75 = vpop.f32.mrf.mxu0
    %v76 = vpop.f32.mrf.mxu0
    %v77 = vadd.f32 0.0, %v76
    %v78 = vpop.f32.mrf.mxu0
    %79 = vdwg.mxu0
    %v80 = vmax.f32 %v74, 0.0
    %v81 = vmax.f32 %v77, 0.0
    %v82 = vpack.c.bf16 %v81, %v80
    %v83 = vld [vmem:[%s2] sm:$0xf]
    %v84 = vld [vmem:[%s2 + $0x4] sm:$0xf]
    %v85 = vld [vmem:[%s2 + $0x8] sm:$0xf]
    %v86 = vld [vmem:[%s2 + $0xc] sm:$0xf]
    %v87 = vld [vmem:[%s2 + $0x10] sm:$0xf]
    %v88 = vld [vmem:[%s2 + $0x14] sm:$0xf]
    %v89 = vld [vmem:[%s2 + $0x18] sm:$0xf]
    %v90 = vld [vmem:[%s2 + $0x1c] sm:$0xf]
    %v99 = vunpack.c.l.b16 %v83
    %v100 = vunpack.c.l.b16 %v84
    %v101 = vunpack.c.l.b16 %v85
    %v102 = vunpack.c.l.b16 %v86
    %v103 = vunpack.c.l.b16 %v87
    %v104 = vunpack.c.l.b16 %v88
    %v105 = vunpack.c.l.b16 %v89
    %v106 = vunpack.c.l.b16 %v90
    %v107 = vpack.c.b16 %v100, %v99
    %v108 = vpack.c.b16 %v102, %v101
    %v109 = vpack.c.b16 %v104, %v103
    %v110 = vpack.c.b16 %v106, %v105
    %vm115 = vcmask 523264
    %v117 = vsel %vm115, %v82, 0
    %119 = vmatprep.subr.bf16.mxu0 0
    %120 = vmatpush1.bf16.msra.mxu0 0
    %121 = vmatprep.subr.bf16.mxu0 0
    %122 = vmatpush1.bf16.msra.mxu0 0
    %123 = vmatprep.subr.bf16.mxu0 0
    %124 = vmatpush1.bf16.msra.mxu0 0
    %125 = vmatprep.subr.bf16.mxu0 0
    %126 = vmatpush1.bf16.msra.mxu0 0
    %127 = vmatprep.subr.bf16.mxu0 0
    %128 = vmatpush1.bf16.msra.mxu0 %v110
    %129 = vmatprep.subr.bf16.mxu0 0
    %130 = vmatpush1.bf16.msra.mxu0 %v109
    %131 = vmatprep.subr.bf16.mxu0 0
    %132 = vmatpush1.bf16.msra.mxu0 %v108
    %133 = vmatprep.subr.bf16.mxu0 0
    %134 = vmatpush1.bf16.msra.mxu0 %v107
    %135 = vmatprep.subr.bf16.mxu0 0
    %136 = vmatpush2.bf16.msra.mxu0 0
    %137 = vmatprep.subr.bf16.mxu0 0
    %138 = vmatpush2.bf16.msra.mxu0 0
    %139 = vmatprep.subr.bf16.mxu0 0
    %140 = vmatpush2.bf16.msra.mxu0 0
    %141 = vmatprep.subr.bf16.mxu0 0
    %142 = vmatpush2.bf16.msra.mxu0 0
    %143 = vmatprep.subr.bf16.mxu0 0
    %144 = vmatpush2.bf16.msra.mxu0 0
    %145 = vmatprep.subr.bf16.mxu0 0
    %146 = vmatpush2.bf16.msra.mxu0 0
    %147 = vmatprep.subr.bf16.mxu0 0
    %148 = vmatpush2.bf16.msra.mxu0 0
    %149 = vmatprep.subr.bf16.mxu0 0
    %150 = vmatpush2.bf16.msra.mxu0 0
    %151 = vmatprep.mubr.bf16.mxu0 0
    %152 = vmatmul.mubr.bf16.gmra.mxu0 %v117
    %v153 = vpop.f32.mrf.mxu0
    %v154 = vadd.f32 %v16, %v153
    %v155 = vpop.f32.mrf.mxu0
    %v156 = vpop.f32.mrf.mxu0
    %v157 = vadd.f32 %v17, %v156
    %v158 = vpop.f32.mrf.mxu0
    %159 = vdwg.mxu0
    %v160 = vsel %vm35, %v154, 0.0
    %161 = vadd.xlane.f32.xlu0 %v160
    %v162 = vpop.xlane.xlu0 %161
    %v163 = vsel %vm35, %v157, 0.0
    %164 = vadd.xlane.f32.xlu0 %v163
    %v165 = vpop.xlane.xlu0 %164
    %v166 = vmul.f32 %v162, 0.03125
    %v167 = vmul.f32 %v165, 0.03125
    %v168 = vmul.f32 %v154, %v154
    %v169 = vmul.f32 %v157, %v157
    %v170 = vsel %vm35, %v168, 0.0
    %171 = vadd.xlane.f32.xlu0 %v170
    %v172 = vpop.xlane.xlu0 %171
    %v173 = vsel %vm35, %v169, 0.0
    %174 = vadd.xlane.f32.xlu0 %v173
    %v175 = vpop.xlane.xlu0 %174
    %v176 = vmul.f32 %v172, 0.03125
    %v177 = vmul.f32 %v175, 0.03125
    %v178 = vmul.f32 %v166, %v166
    %v179 = vmul.f32 %v167, %v167
    %v180 = vsub.f32 %v176, %v178
    %v181 = vsub.f32 %v177, %v179
    %v182 = vsub.f32 %v154, %v166
    %v183 = vsub.f32 %v157, %v167
    %v184 = vadd.f32 %v180, 1e-05
    %v185 = vadd.f32 %v181, 1e-05
    %v186 = vrsqrt.pop %v184
    %v187 = vrsqrt.pop %v185
    %v188 = vmul.f32 %v182, %v186
    %v189 = vmul.f32 %v183, %v187
    %190 = vst.msk [vmem:[#allocation2] sm:$0xff] %vm35, %v188
    %191 = vst.msk [vmem:[#allocation2 + $0x8] sm:$0xff] %vm35, %v189
    // Predicated region
    $region14: #{tpu_custom_call.1} parent=1 // pred_check
      _
    $region15: #{tpu_custom_call.1} parent=1 // pred_check_branch
      %193 = sbr.rel (0) target = $region17
    $region16: #{tpu_custom_call.1} parent=1 // pred_region
      %s195 = ssub.s32 256, 256
      %196 = vsyncadd [#allocation3], %s195
      %s197 = sshll.u32 [#allocation2], 4
      %s198 = int_to_ptr.vmem [resolvable:$true] %s197
      %203 = dma.vmem_to_hbm [thread:$0]  %s198, 256, %s3, [#allocation3], 128, 128, 8
    $region17: #{tpu_custom_call.1} parent=1 // pred_fallthru
      _
    // Predicated region
    $region18: #{tpu_custom_call.1} parent=1 // pred_check
      _
    $region19: #{tpu_custom_call.1} parent=1 // pred_check_branch
      %205 = sbr.rel (0) target = $region21
    $region20: #{tpu_custom_call.1} parent=1 // pred_region
      %206 = dma.done [#allocation3], 256
    $region21: #{tpu_custom_call.1} parent=1 // pred_fallthru
      _
    %207 = vsyncpa [#allocation3], 1

</llo_original>
